<compile_context>
chip_gen: v5e
topology: v5e:2x2
jax: 0.10.0
libtpu: 0.0.40
codegen_flags: <defaults>
</compile_context>

<pallas_src>
import numpy as np
import jax
import jax.numpy as jnp
from jax import lax
from jax.experimental import pallas as pl
from jax.experimental.pallas import tpu as pltpu


# ---------------------------------------------------------------------------
# Kernel 1: beam-tile of the encoder memory   [B, S, H] -> [B*beam, S, H]
# Each source row is DMA'd from HBM exactly once and broadcast to `beam`
# contiguous output rows inside the kernel (same layout as FT tile()).
# ---------------------------------------------------------------------------
def _tile_kernel(mem_ref, out_ref):
    out_ref[...] = jnp.broadcast_to(mem_ref[...], out_ref.shape)


def _pick_s_tile(S, H, beam, itemsize, budget_bytes=8 * 1024 * 1024):
    # Double-buffered working set: 2 * [(1, s, H) in  +  (beam, s, H) out].
    # Keep it under ~8 MiB so it fits v5e's 16 MiB / v7x's 32 MiB default scoped VMEM.
    full_bytes = 2 * (1 + beam) * S * H * itemsize
    if full_bytes <= budget_bytes:
        return S
    per_row = 2 * (1 + beam) * H * itemsize
    max_rows = max(8, budget_bytes // per_row)
    best = None
    for d in range(8, S, 8):          # sublane constraint: s_tile multiple of 8 (or == S)
        if S % d == 0 and d <= max_rows:
            best = d
    return best if best is not None else S


def tile_memory(memory, beam_size):
    B, S, H = memory.shape
    s_tile = _pick_s_tile(S, H, beam_size, memory.dtype.itemsize)
    return pl.pallas_call(
        _tile_kernel,
        out_shape=jax.ShapeDtypeStruct((B * beam_size, S, H), memory.dtype),
        grid=(B, S // s_tile),
        in_specs=[pl.BlockSpec((1, s_tile, H), lambda i, j: (i, j, 0))],
        out_specs=pl.BlockSpec((beam_size, s_tile, H), lambda i, j: (i, j, 0)),
        compiler_params=pltpu.CompilerParams(
            dimension_semantics=("parallel", "parallel")),
    )(memory)


# ---------------------------------------------------------------------------
# Kernel 2: gather_tree (beam backtracking) with fused length computation.
# All arrays are flattened 1-D int32 in SMEM (scalar, data-dependent access).
# Output beams are written directly in (B, K, T) layout so no transpose is
# needed afterwards; the per-column non-end-token count is produced for free
# during the forward pass.
# ---------------------------------------------------------------------------
def _make_gather_tree_kernel(T, B, K, end_token):
    # NOTE: end_token is a plain Python int; all scalar constants are built
    # inside the kernel trace (fixes the "captures constants" error).
    def kernel(step_ref, parent_ref, lens_ref, beams_ref, len_ref):
        end32 = jnp.full((), end_token, dtype=jnp.int32)
        zero = jnp.full((), 0, dtype=jnp.int32)
        one = jnp.full((), 1, dtype=jnp.int32)

        def flat_in(t, b, p):            # input layout  (T, B, K), flattened
            return t * (B * K) + b * K + p

        def per_column(col, carry):
            b = col // K
            k = col % K
            L = jnp.maximum(jnp.minimum(lens_ref[b], T), 0)   # clamp to [0, T]
            base = (b * K + k) * T       # output layout (B, K, T), flattened

            # 1) only the tail [L, T) is initialized to end_token; [0, L) is
            #    fully overwritten by the backward trace below.
            def init_body(t, c):
                beams_ref[base + t] = end32
                return c

            lax.fori_loop(L, T, init_body, zero)

            # 2) backward trace through parent pointers (only if L > 0),
            #    dynamic (L-bounded) trip count: no wasted predicated iters.
            @pl.when(L > 0)
            def _():
                last = L - 1
                beams_ref[base + last] = step_ref[flat_in(last, b, k)]
                parent0 = parent_ref[flat_in(last, b, k)]

                def bwd_body(j, parent):
                    level = L - 2 - j
                    beams_ref[base + level] = step_ref[flat_in(level, b, parent)]
                    return parent_ref[flat_in(level, b, parent)]

                lax.fori_loop(0, L - 1, bwd_body, parent0)

            # 3) forward pass: everything after the first end_token becomes
            #    end_token; count surviving non-end tokens (fused lengths).
            def fwd_body(t, carry2):
                finished, cnt = carry2
                cur = beams_ref[base + t]
                new_val = jnp.where(finished > 0, end32, cur)
                beams_ref[base + t] = new_val
                cnt = cnt + jnp.where(new_val != end32, one, zero)
                finished = jnp.where(cur == end32, one, finished)
                return finished, cnt

            _, length = lax.fori_loop(0, L, fwd_body, (zero, zero))
            len_ref[b * K + k] = length
            return carry

        lax.fori_loop(0, B * K, per_column, zero)

    return kernel


def gather_tree_with_lengths(step_ids, parent_ids, max_lens, end_token):
    # TODO(synk): at production T/B/K the whole-array SMEM staging should be split
    # into per-batch slabs (blocked SMEM / manual HBM->SMEM DMA) for megacore split.
    T, B, K = step_ids.shape
    kernel = _make_gather_tree_kernel(T, B, K, int(end_token))
    smem = pl.BlockSpec(memory_space=pltpu.MemorySpace.SMEM)
    beams_flat, len_flat = pl.pallas_call(
        kernel,
        out_shape=(jax.ShapeDtypeStruct((B * K * T,), jnp.int32),
                   jax.ShapeDtypeStruct((B * K,), jnp.int32)),
        in_specs=[smem, smem, smem],
        out_specs=(smem, smem),
    )(
        step_ids.reshape(-1).astype(jnp.int32),
        parent_ids.reshape(-1).astype(jnp.int32),
        max_lens.astype(jnp.int32),
    )
    return beams_flat.reshape(B, K, T), len_flat.reshape(B, K)


# ---------------------------------------------------------------------------
# finalize()  (mirrors the PyTorch function; transpose + length reduction are
# fused into the gather_tree kernel)
# ---------------------------------------------------------------------------
def finalize(beam_size, output_ids, parent_ids, out_seq_lens, end_id, max_seq_len):
    out_seq_lens = out_seq_lens.reshape(-1, beam_size)
    max_lens = jnp.max(out_seq_lens, axis=1)
    shape = (max_seq_len, -1, beam_size)
    output_ids = output_ids.reshape(shape)
    parent_ids = parent_ids.reshape(shape)
    ids, lengths = gather_tree_with_lengths(output_ids, parent_ids, max_lens, end_id)
    return ids, lengths                      # ids: (B, K, T), lengths: (B, K)


# ---------------------------------------------------------------------------
# Deterministic stand-in for the external FasterTransformer Decoding op.
# ---------------------------------------------------------------------------
def synthetic_decoding_outputs(batch, beam, max_seq_len, vocab, end_id, seed=123):
    # TODO(synk): torch.classes.FasterTransformer.Decoding (full transformer decoder +
    # beam search over weights.w) is an external compiled op with no Pallas equivalent;
    # its outputs (output_ids, parent_ids, out_seq_lens) are synthesized deterministically.
    key = jax.random.PRNGKey(seed)
    k1, k2, k3 = jax.random.split(key, 3)
    out_seq_lens = jax.random.randint(k3, (batch * beam,), 2, max_seq_len + 1, dtype=jnp.int32)
    tokens = jax.random.randint(k1, (max_seq_len, batch, beam), 3, vocab, dtype=jnp.int32)
    lens3 = out_seq_lens.reshape(batch, beam)[None, :, :]
    t_idx = jnp.arange(max_seq_len, dtype=jnp.int32)[:, None, None]
    output_ids = jnp.where(t_idx >= lens3 - 1, jnp.int32(end_id), tokens)
    parent_ids = jax.random.randint(k2, (max_seq_len, batch, beam), 0, 2 * beam, dtype=jnp.int32)
    return output_ids.reshape(-1), parent_ids.reshape(-1), out_seq_lens


# ---------------------------------------------------------------------------
# CustomDecoding forward (Pallas version)
# ---------------------------------------------------------------------------
class CustomDecodingPallas:
    def __init__(self, layer_num, head_num, head_size, vocab_size, start_id, end_id,
                 beam_search_diversity_rate=0.0):
        # The hidden_dim=768 decoder weights only feed the external FasterTransformer
        # op (untranslated), so no weight tensors are needed here.
        self.layer_num = layer_num
        self.head_num = head_num
        self.head_size = head_size
        self.vocab_size = vocab_size
        self.start_id = start_id
        self.end_id = end_id
        self.beam_search_diversity_rate = beam_search_diversity_rate
        self._last_extended_memory = None

    def forward(self, batch_size, beam_size, max_seq_len, memory, memory_seq_lens):
        extended_memory = tile_memory(memory, beam_size)        # Pallas kernel
        self._last_extended_memory = extended_memory
        # NOTE: tile(memory_seq_lens, beam) is only consumed by the untranslated external
        # decoding op, so it is not materialized here (dead work removed).

        output_ids, parent_ids, out_seq_lens = synthetic_decoding_outputs(
            batch_size, beam_size, max_seq_len, self.vocab_size, self.end_id)

        parent_ids = parent_ids % beam_size
        beams, lengths = finalize(beam_size, output_ids, parent_ids, out_seq_lens,
                                  self.end_id, max_seq_len)
        return beams, lengths


# ---------------------------------------------------------------------------
# Pure-numpy reference (port of the PyTorch gather_tree) for verification.
# ---------------------------------------------------------------------------
def _gather_tree_ref(step_ids, parent_ids, max_lens, end_token):
    T, B, K = step_ids.shape
    beams = np.full_like(step_ids, end_token)
    for i in range(B * K):
        b, k = i // K, i % K
        L = min(T, int(max_lens[b]))
        if L <= 0:
            continue
        beams[L - 1, b, k] = step_ids[L - 1, b, k]
        parent = parent_ids[L - 1, b, k]
        for level in range(L - 2, -1, -1):
            beams[level, b, k] = step_ids[level, b, parent]
            parent = parent_ids[level, b, parent]
        finished = False
        for t in range(L):
            if finished:
                beams[t, b, k] = end_token
            elif beams[t, b, k] == end_token:
                finished = True
    return beams


if __name__ == "__main__":
    batch, beam, max_seq_len = 2, 4, 8
    mem_seq, hidden, vocab = 16, 32, 32
    start_id, end_id = 1, 2

    key = jax.random.PRNGKey(0)
    memory = jax.random.normal(key, (batch, mem_seq, hidden), dtype=jnp.float32)
    memory_seq_lens = jnp.full((batch,), mem_seq, dtype=jnp.int32)

    model = CustomDecodingPallas(layer_num=2, head_num=4, head_size=8,
                                 vocab_size=vocab, start_id=start_id, end_id=end_id)
    beams, lengths = model.forward(batch, beam, max_seq_len, memory, memory_seq_lens)
    jax.block_until_ready((beams, lengths))

    # -------- verification against a numpy port of the PyTorch reference --------
    out_ids, par_ids, out_lens = synthetic_decoding_outputs(batch, beam, max_seq_len, vocab, end_id)
    par_ids = par_ids % beam
    step_np = np.asarray(out_ids).reshape(max_seq_len, batch, beam)
    par_np = np.asarray(par_ids).reshape(max_seq_len, batch, beam)
    max_lens_np = np.asarray(out_lens).reshape(batch, beam).max(axis=1)
    ref_tbk = _gather_tree_ref(step_np, par_np, max_lens_np, end_id)
    ref_ids = np.transpose(ref_tbk, (1, 2, 0))                      # (B, K, T)
    ref_lengths = (ref_ids != end_id).astype(np.int32).sum(-1)

    np.testing.assert_array_equal(np.asarray(beams), ref_ids)
    np.testing.assert_array_equal(np.asarray(lengths), ref_lengths)
    np.testing.assert_array_equal(
        np.asarray(model._last_extended_memory),
        np.repeat(np.asarray(memory), beam, axis=0),
    )

    print("KERNEL_OK")
</pallas_src>

<mosaic_0001>
module attributes {stable_mosaic.version = 11 : i64} {
  func.func @_tile_kernel(%arg0: i32, %arg1: i32, %arg2: memref<1x16x32xf32, #tpu.memory_space<vmem>>, %arg3: memref<4x16x32xf32, #tpu.memory_space<vmem>>) attributes {dimension_semantics = [#tpu.dimension_semantics<parallel>, #tpu.dimension_semantics<parallel>], iteration_bounds = array<i64: 2, 1>, scalar_prefetch = 0 : i64, scratch_operands = 0 : i64, tpu.core_type = #tpu.core_type<tc>, window_params = [{transform_indices = @transform_0, window_bounds = array<i64: 1, 16, 32>}, {transform_indices = @transform_1, window_bounds = array<i64: 4, 16, 32>}]} {
    %c0 = arith.constant 0 : index
    %c0_0 = arith.constant 0 : index
    %c0_1 = arith.constant 0 : index
    %0 = vector.load %arg2[%c0, %c0_0, %c0_1] : memref<1x16x32xf32, #tpu.memory_space<vmem>>, vector<1x16x32xf32>
    %1 = vector.shape_cast %0 : vector<1x16x32xf32> to vector<1x16x32xf32>
    %2 = vector.broadcast %1 : vector<1x16x32xf32> to vector<4x16x32xf32>
    %c0_2 = arith.constant 0 : index
    %c0_3 = arith.constant 0 : index
    %c0_4 = arith.constant 0 : index
    %3 = vector.load %arg3[%c0_2, %c0_3, %c0_4] : memref<4x16x32xf32, #tpu.memory_space<vmem>>, vector<4x16x32xf32>
    tpu.vector_store %arg3[%c0_2, %c0_3, %c0_4], %2 {strides = array<i32>} : memref<4x16x32xf32, #tpu.memory_space<vmem>>, vector<4x16x32xf32>,
    return
  }
  func.func @transform_0(%arg0: i32, %arg1: i32) -> (i32, i32, i32) {
    %c0_i32 = arith.constant 0 : i32
    %c0_i32_0 = arith.constant 0 : i32
    return %arg0, %arg1, %c0_i32 : i32, i32, i32
  }
  func.func @transform_1(%arg0: i32, %arg1: i32) -> (i32, i32, i32) {
    %c0_i32 = arith.constant 0 : i32
    %c0_i32_0 = arith.constant 0 : i32
    return %arg0, %arg1, %c0_i32 : i32, i32, i32
  }
}

</mosaic_0001>

<llo_original>
// kernel: tpu_custom_call.1
$region0: #{tpu_custom_call.1}
  #allocation0 [shape = 'u32[]', space=smem, size = 0x4, offset = 0x4, fixed_abs, tag = 'smem constant byte address 0x4 - core index']
  #allocation1 [shape = 'u32[72,128]{1,0:T(1,128)}', space=vmem, size = 0x9000, scoped, tag = 'internal scratch']
  %s0 = inlined_call_operand.hbm [shape: f32[2,16,32], index: 0, kind: input, shape index: {}]
  %s1 = inlined_call_operand.hbm [shape: f32[8,16,32], index: 1, kind: output, shape index: {}]
  %s2 = sld [smem:[#allocation0]]
  $region41: #{tpu_custom_call.1} parent=0
    _
  %s4 = ssub.s32 1, %s2
  %s5 = scalar_select 0, %s4, %s2
  $region1: #{tpu_custom_call.1} parent=0
    #allocation2 [shape = 'u8[16384]{0}', space=vmem, size = 0x4000, scoped, tag = 'input window, operand 0']
    #allocation3 [shape = 's32[2]{0}', space=sflag, size = 0x8, scoped, tag = 'scoped memory for tpu_custom_call.1']
    #allocation4 [shape = 's32[2]{0}', space=sflag, size = 0x8, scoped, tag = 'scoped memory for tpu_custom_call.1']
    #allocation5 [shape = 'u8[65536]{0}', space=vmem, size = 0x10000, scoped, tag = 'output window, operand 0']
    %6 = vsyncpa [#allocation3], 0
    %s7 = scalar_lea.sflag [#allocation3], 1
    %8 = vsyncpa %s7, 0
    %9 = vsyncpa [#allocation4], 0
    %s10 = scalar_lea.sflag [#allocation4], 1
    %11 = vsyncpa %s10, 0
    loop: start=0, step=1, limit=4
    $region2: #{tpu_custom_call.1} parent=1 // loop_pre_header
      _
    $region3: #{tpu_custom_call.1} parent=1 // loop_header
      %s13 = sphi 0, %s17
      %p14 = scmp.ge.s32.totalorder %s13, 4
      %s20 = sphi 0, %s32
      %s21 = sphi 0, %s28
      %s22 = sphi 0, %s20
      %s23 = sphi 0, %s21
      %s24 = sphi 0, %s22
      %s25 = sphi 0, %s23
      %s37 = sphi 0, %s39
      %s40 = sphi 0, %s37
      %s41 = sphi 0, %s40
      %s57 = sphi 0, %s41
      %s65 = sphi 0, %s67
      %s68 = sphi 0, %s65
      %s69 = sphi 0, %s68
      %s85 = sphi 0, %s69
    $region4: #{tpu_custom_call.1} parent=1 // loop_header_branch
      %16 = sbr.rel (%p14) target = $region8
    $region5: #{tpu_custom_call.1} parent=1 // loop_body
      %s18 = ssub.s32 %s13, 1
      %s19 = ssub.s32 %s13, 2
      %s26 = sadd.s32 1, %s21
      %p27 = scmp.ge.s32.totalorder %s26, 1
      %s28 = scalar_select %p27, 0, %s26
      %s29 = sadd.s32 1, %s20
      %s30 = scalar_select %p27, %s29, %s20
      %p31 = scmp.ge.s32.totalorder %s30, 2
      %s32 = scalar_select %p31, 0, %s30
      %s33 = ssub.s32 %s20, %s32
      %s34 = ssub.s32 %s21, %s28
      %s35 = sor.u32 %s33, %s34
      %p36 = scmp.eq.s32.totalorder %s35, 0
      %s38 = sadd.s32 %s37, 1
      %s39 = scalar_select %p36, %s37, %s38
      %p42 = pneg %p36
      %p43 = scmp.eq.s32.totalorder %s13, 1
      %p44 = por %p42, %p43
      %p45 = scmp.ne.s32.totalorder %s37, %s40
      %p46 = scmp.eq.s32.totalorder %s13, 0
      %p47 = por %p45, %p46
      %p48 = scmp.ne.s32.totalorder %s37, %s40
      %p49 = scmp.eq.s32.totalorder %s18, 1
      %p50 = por %p48, %p49
      %p51 = scmp.ne.s32.totalorder %s40, %s41
      %p52 = scmp.eq.s32.totalorder %s18, 0
      %p53 = por %p51, %p52
      %p54 = scmp.ne.s32.totalorder %s40, %s41
      %p55 = scmp.eq.s32.totalorder %s19, 1
      %p56 = por %p54, %p55
      %p58 = scmp.ne.s32.totalorder %s41, %s57
      %p59 = scmp.eq.s32.totalorder %s19, 0
      %p60 = por %p58, %p59
      %s61 = ssub.s32 %s20, %s32
      %s62 = ssub.s32 %s21, %s28
      %s63 = sor.u32 %s61, %s62
      %p64 = scmp.eq.s32.totalorder %s63, 0
      %s66 = sadd.s32 %s65, 1
      %s67 = scalar_select %p64, %s65, %s66
      %p70 = pneg %p64
      %p71 = scmp.eq.s32.totalorder %s13, 1
      %p72 = por %p70, %p71
      %p73 = scmp.ne.s32.totalorder %s65, %s68
      %p74 = scmp.eq.s32.totalorder %s13, 0
      %p75 = por %p73, %p74
      %p76 = scmp.ne.s32.totalorder %s65, %s68
      %p77 = scmp.eq.s32.totalorder %s18, 1
      %p78 = por %p76, %p77
      %p79 = scmp.ne.s32.totalorder %s68, %s69
      %p80 = scmp.eq.s32.totalorder %s18, 0
      %p81 = por %p79, %p80
      %p82 = scmp.ne.s32.totalorder %s68, %s69
      %p83 = scmp.eq.s32.totalorder %s19, 1
      %p84 = por %p82, %p83
      %p86 = scmp.ne.s32.totalorder %s69, %s85
      %p87 = scmp.eq.s32.totalorder %s19, 0
      %p88 = por %p86, %p87
      %p89 = scmp.le.s32.totalorder 1, %s13
      %p90 = scmp.lt.s32.totalorder %s13, 3
      %p91 = pnand %p89, %p90
      %p92 = pneg %p91
      // Predicated region
      $region9: #{tpu_custom_call.1} parent=5 // pred_check
        _
      $region10: #{tpu_custom_call.1} parent=5 // pred_check_branch
        %94 = sbr.rel (%p91) target = $region12
      $region11: #{tpu_custom_call.1} parent=5 // pred_region
        %s95 = ssub.s32 %s13, 1
      $region12: #{tpu_custom_call.1} parent=5 // pred_fallthru
        _
      %p96 = scmp.lt.s32.totalorder %s13, 2
      // Predicated region
      $region13: #{tpu_custom_call.1} parent=5 // pred_check
        %p97 = pneg %p96
      $region14: #{tpu_custom_call.1} parent=5 // pred_check_branch
        %99 = sbr.rel (%p97) target = $region16
      $region15: #{tpu_custom_call.1} parent=5 // pred_region
        // Predicated region
        $region17: #{tpu_custom_call.1} parent=15 // pred_check
          %p100 = pneg %p47
        $region18: #{tpu_custom_call.1} parent=15 // pred_check_branch
          %102 = sbr.rel (%p100) target = $region20
        $region19: #{tpu_custom_call.1} parent=15 // pred_region
          %s103 = sand.u32 %s37, 1
          %s104 = scalar_lea.sflag [#allocation3], %s103
          %s105 = sand.u32 %s37, 1
          %s106 = smul.addr %s105, 16
          %s107 = scalar_lea.vmem [#allocation2], %s106
          %s108 = smul.u32 2, %s21
          %110 = vsyncadd %s104, 0
          %s111 = smul.addr %s20, 2
          %s112 = sadd.s32 %s108, %s111
          %s113 = smul.addr %s112, 8
          %s114 = scalar_lea.hbm %s0, %s113
          %s115 = sshll.u32 %s114, 4
          %s116 = int_to_ptr.hbm [resolvable:$true] %s115
          %s117 = sshll.u32 %s107, 4
          %s118 = int_to_ptr.vmem [resolvable:$true] %s117
          %123 = dma.hbm_to_vmem [thread:$0]  %s116, 256, %s118, %s104, 128, 128, 8
        $region20: #{tpu_custom_call.1} parent=15 // pred_fallthru
          _
      $region16: #{tpu_custom_call.1} parent=5 // pred_fallthru
        _
      %p124 = scmp.le.s32.totalorder 1, %s13
      %p125 = scmp.lt.s32.totalorder %s13, 3
      %p126 = pnand %p124, %p125
      %p127 = pneg %p126
      // Predicated region
      $region21: #{tpu_custom_call.1} parent=5 // pred_check
        _
      $region22: #{tpu_custom_call.1} parent=5 // pred_check_branch
        %129 = sbr.rel (%p126) target = $region24
      $region23: #{tpu_custom_call.1} parent=5 // pred_region
        %s130 = ssub.s32 %s13, 1
        %s131 = sand.u32 %s40, 1
        %s132 = scalar_lea.sflag [#allocation3], %s131
        %s133 = sand.u32 %s40, 1
        %s134 = smul.addr %s133, 16
        %s135 = scalar_lea.vmem [#allocation2], %s134
        // Predicated region
        $region25: #{tpu_custom_call.1} parent=23 // pred_check
          %p136 = pneg %p53
        $region26: #{tpu_custom_call.1} parent=23 // pred_check_branch
          %138 = sbr.rel (%p136) target = $region28
        $region27: #{tpu_custom_call.1} parent=23 // pred_region
          %140 = dma.done %s132, 256
        $region28: #{tpu_custom_call.1} parent=23 // pred_fallthru
          _
        %s141 = sand.u32 %s40, 1
        %s142 = scalar_lea.sflag [#allocation3], %s141
        %s143 = sand.u32 %s40, 1
        %s144 = smul.addr %s143, 16
        %s145 = scalar_lea.vmem [#allocation2], %s144
        %p146 = pneg %p53
        %p147 = pneg %p50
        %p148 = pneg %p81
        %p149 = pneg %p78
        %s150 = sand.u32 %s68, 1
        %s151 = scalar_lea.sflag [#allocation4], %s150
        %s152 = sand.u32 %s68, 1
        %s153 = smul.addr %s152, 64
        %s154 = scalar_lea.vmem [#allocation5], %s153
        %s155 = smul.u32 2, %s23
        %s156 = smul.u32 4, %s22
        %s157 = smul.u32 2, %s23
        %v158 = vld [vmem:[%s135] sm:$0xff]
        %v159 = vld [vmem:[%s135 + $0x8] sm:$0xff]
        %vm160 = vcmask 261120
        %161 = vst.msk [vmem:[%s154] sm:$0xff] %vm160, %v158
        %162 = vst.msk [vmem:[%s154 + $0x8] sm:$0xff] %vm160, %v159
        %163 = vst.msk [vmem:[%s154 + $0x10] sm:$0xff] %vm160, %v158
        %164 = vst.msk [vmem:[%s154 + $0x18] sm:$0xff] %vm160, %v159
        %165 = vst.msk [vmem:[%s154 + $0x20] sm:$0xff] %vm160, %v158
        %166 = vst.msk [vmem:[%s154 + $0x28] sm:$0xff] %vm160, %v159
        %167 = vst.msk [vmem:[%s154 + $0x30] sm:$0xff] %vm160, %v158
        %168 = vst.msk [vmem:[%s154 + $0x38] sm:$0xff] %vm160, %v159
        %s169 = sand.u32 %s68, 1
        %s170 = scalar_lea.sflag [#allocation4], %s169
        %s171 = sand.u32 %s68, 1
        %s172 = smul.addr %s171, 64
        %s173 = scalar_lea.vmem [#allocation5], %s172
        // Predicated region
        $region29: #{tpu_custom_call.1} parent=23 // pred_check
          %p174 = pneg %p78
        $region30: #{tpu_custom_call.1} parent=23 // pred_check_branch
          %176 = sbr.rel (%p174) target = $region32
        $region31: #{tpu_custom_call.1} parent=23 // pred_region
          %s177 = smul.u32 4, %s22
          %s178 = smul.u32 2, %s23
          %180 = vsyncadd %s170, 0
          %s181 = smul.addr %s177, 2
          %s182 = sadd.s32 %s178, %s181
          %s183 = smul.addr %s182, 8
          %s184 = scalar_lea.hbm %s1, %s183
          %s185 = sshll.u32 %s173, 4
          %s186 = int_to_ptr.vmem [resolvable:$true] %s185
          %s187 = sshll.u32 %s184, 4
          %s188 = int_to_ptr.hbm [resolvable:$true] %s187
          %193 = dma.vmem_to_hbm [thread:$0]  %s186, 1024, %s188, %s170, 128, 128, 8
        $region32: #{tpu_custom_call.1} parent=23 // pred_fallthru
          _
      $region24: #{tpu_custom_call.1} parent=5 // pred_fallthru
        _
      %p194 = scmp.le.s32.totalorder 2, %s13
      // Predicated region
      $region33: #{tpu_custom_call.1} parent=5 // pred_check
        %p195 = pneg %p194
      $region34: #{tpu_custom_call.1} parent=5 // pred_check_branch
        %197 = sbr.rel (%p195) target = $region36
      $region35: #{tpu_custom_call.1} parent=5 // pred_region
        %s198 = ssub.s32 %s13, 2
        // Predicated region
        $region37: #{tpu_custom_call.1} parent=35 // pred_check
          %p199 = pneg %p84
        $region38: #{tpu_custom_call.1} parent=35 // pred_check_branch
          %201 = sbr.rel (%p199) target = $region40
        $region39: #{tpu_custom_call.1} parent=35 // pred_region
          %s202 = sand.u32 %s69, 1
          %s203 = scalar_lea.sflag [#allocation4], %s202
          %s204 = sand.u32 %s69, 1
          %s205 = smul.addr %s204, 64
          %s206 = scalar_lea.vmem [#allocation5], %s205
          %208 = dma.done %s203, 1024
        $region40: #{tpu_custom_call.1} parent=35 // pred_fallthru
          _
      $region36: #{tpu_custom_call.1} parent=5 // pred_fallthru
        _
    $region6: #{tpu_custom_call.1} parent=1 // loop_footer
      %s17 = sadd.s32 1, %s13
    $region7: #{tpu_custom_call.1} parent=1 // loop_footer_branch
      %12 = sbr.rel target = $region3
    $region8: #{tpu_custom_call.1} parent=1 // loop_exit
      _
    %209 = vsyncpa [#allocation3], 1
    %s210 = scalar_lea.sflag [#allocation3], 1
    %211 = vsyncpa %s210, 1
    %212 = vsyncpa [#allocation4], 1
    %s213 = scalar_lea.sflag [#allocation4], 1
    %214 = vsyncpa %s213, 1

</llo_original>
